<compile_context>
chip_gen: v6e
topology: v6e:2x2x1
jax: 0.10.0
libtpu: 0.0.40
codegen_flags: <defaults>
</compile_context>

<pallas_src>
import functools

import jax
import jax.numpy as jnp
from jax.experimental import pallas as pl
from jax.experimental.pallas import tpu as pltpu

HIDDEN = 16
FC1 = 64
G4 = 4 * HIDDEN  # == FC1 == 64, shared lane width of the parameter slab


def lstm_model_kernel(x_ref, p_ref, out_ref, *, T, Bp, I):
    H = HIDDEN

    # ---- Carve the packed parameter slab (all static row slices). ----
    r = 0
    wih = p_ref[r:r + I, :]; r += I            # (I, 4H)  gate cols (i, f, o, g)
    whh = p_ref[r:r + H, :]; r += H            # (H, 4H)
    b   = p_ref[r:r + 1, :]; r += 1            # (1, 4H)  b_ih + b_hh, permuted
    fc1w = p_ref[r:r + H, :]; r += H           # (H, FC1)
    fc1b = p_ref[r:r + 1, :]; r += 1           # (1, FC1)
    fc2w = p_ref[r:r + 1, :]; r += 1           # (1, FC1)
    fc2b = p_ref[r:r + 1, 0:1]                 # (1, 1)

    # --- Non-recurrent pass: input projection for ALL timesteps in one matmul.
    # x_ref is (T*Bp, I), time-major: rows [t*Bp, (t+1)*Bp) hold timestep t.
    zx = jnp.dot(x_ref[...], wih, preferred_element_type=jnp.float32) + b   # (T*Bp, 4H)

    h = jnp.zeros((Bp, H), jnp.float32)
    c = jnp.zeros((Bp, H), jnp.float32)

    # --- Serial recurrence, fully unrolled (T small & static) so the scheduler
    # sees the whole dependence chain.  Gate column order is (i, f, o, g).
    for t in range(T):
        z = zx[t * Bp:(t + 1) * Bp, :] + jnp.dot(
            h, whh, preferred_element_type=jnp.float32)                     # (Bp, 4H)
        s = jax.nn.sigmoid(z[:, :3 * H])                                    # i | f | o
        g_g = jnp.tanh(z[:, 3 * H:])
        i_g = s[:, 0:H]
        f_g = s[:, H:2 * H]
        o_g = s[:, 2 * H:3 * H]
        c = f_g * c + i_g * g_g
        h = o_g * jnp.tanh(c)

    # --- Head.  Dropout(0.2) in eval mode == identity.
    y1 = jnp.dot(h, fc1w, preferred_element_type=jnp.float32) + fc1b        # (Bp, FC1)
    y1 = jnp.maximum(y1, 0.0)
    # fc2 has N=1: VPU multiply + lane reduction instead of a 1-column MXU matmul.
    out_ref[...] = jnp.sum(y1 * fc2w, axis=-1, keepdims=True) + fc2b        # (Bp, 1)


def pack_params(params):
    """Pack all weights/biases into one (rows, 64) f32 slab (built once)."""
    def permute_gate_cols(w_t):               # (K, 4H), column blocks i,f,g,o -> i,f,o,g
        i, f, g, o = jnp.split(w_t, 4, axis=-1)
        return jnp.concatenate([i, f, o, g], axis=-1)

    wih_t = permute_gate_cols(params["w_ih"].T)                             # (I, 4H)
    whh_t = permute_gate_cols(params["w_hh"].T)                             # (H, 4H)
    b = permute_gate_cols((params["b_ih"] + params["b_hh"]).reshape(1, G4)) # (1, 4H)
    fc1w_t = params["fc1_w"].T                                              # (H, FC1)
    fc1b = params["fc1_b"].reshape(1, FC1)
    fc2w = params["fc2_w"].reshape(1, FC1)
    fc2b = jnp.pad(params["fc2_b"].reshape(1, 1), ((0, 0), (0, FC1 - 1)))   # (1, FC1)

    slab = jnp.concatenate([wih_t, whh_t, b, fc1w_t, fc1b, fc2w, fc2b], axis=0)
    pad = (-slab.shape[0]) % 8                # sublane-align the slab
    if pad:
        slab = jnp.pad(slab, ((0, pad), (0, 0)))
    return slab.astype(jnp.float32)


@jax.jit
def lstm_model_forward(x, packed_params):
    """x: (B, T, I) f32, packed_params: (rows, 64) f32 -> (B, 1) f32."""
    B, T, I = x.shape
    Bp = ((B + 7) // 8) * 8                   # pad batch to the sublane quantum

    # (B, T, I) -> time-major, batch-padded, flattened to (T*Bp, I): the input
    # projection becomes one matmul and per-step slices are sublane-aligned rows.
    x_tm = jnp.transpose(x, (1, 0, 2))
    x_tm = jnp.pad(x_tm, ((0, 0), (0, Bp - B), (0, 0)))
    x2d = x_tm.reshape(T * Bp, I)

    kernel = functools.partial(lstm_model_kernel, T=T, Bp=Bp, I=I)
    out = pl.pallas_call(
        kernel,
        out_shape=jax.ShapeDtypeStruct((Bp, 1), jnp.float32),
        compiler_params=pltpu.CompilerParams(vmem_limit_bytes=32 * 1024 * 1024),
    )(x2d, packed_params)
    return out[:B]


def make_params(key, input_size):
    ks = jax.random.split(key, 8)
    s = 0.1
    return {
        "w_ih": s * jax.random.normal(ks[0], (4 * HIDDEN, input_size), jnp.float32),
        "w_hh": s * jax.random.normal(ks[1], (4 * HIDDEN, HIDDEN), jnp.float32),
        "b_ih": s * jax.random.normal(ks[2], (4 * HIDDEN,), jnp.float32),
        "b_hh": s * jax.random.normal(ks[3], (4 * HIDDEN,), jnp.float32),
        "fc1_w": s * jax.random.normal(ks[4], (FC1, HIDDEN), jnp.float32),
        "fc1_b": s * jax.random.normal(ks[5], (FC1,), jnp.float32),
        "fc2_w": s * jax.random.normal(ks[6], (1, FC1), jnp.float32),
        "fc2_b": s * jax.random.normal(ks[7], (1,), jnp.float32),
    }


def reference_forward(x, p):
    """Pure-JAX reference matching PyTorch LSTM semantics (gate order i,f,g,o)."""
    B, T, I = x.shape
    h = jnp.zeros((B, HIDDEN), jnp.float32)
    c = jnp.zeros((B, HIDDEN), jnp.float32)
    for t in range(T):
        z = x[:, t, :] @ p["w_ih"].T + h @ p["w_hh"].T + p["b_ih"] + p["b_hh"]
        i_g = jax.nn.sigmoid(z[:, 0:HIDDEN])
        f_g = jax.nn.sigmoid(z[:, HIDDEN:2 * HIDDEN])
        g_g = jnp.tanh(z[:, 2 * HIDDEN:3 * HIDDEN])
        o_g = jax.nn.sigmoid(z[:, 3 * HIDDEN:4 * HIDDEN])
        c = f_g * c + i_g * g_g
        h = o_g * jnp.tanh(c)
    y = jnp.maximum(h @ p["fc1_w"].T + p["fc1_b"], 0.0)
    return y @ p["fc2_w"].T + p["fc2_b"]


if __name__ == "__main__":
    key = jax.random.PRNGKey(0)
    kx, kp = jax.random.split(key)
    B, T, I = 2, 8, 4
    x = jax.random.normal(kx, (B, T, I), jnp.float32)
    params = make_params(kp, I)
    packed = pack_params(params)              # built once, reused every call

    out = jax.block_until_ready(lstm_model_forward(x, packed))
    ref = reference_forward(x, params)
    assert out.shape == (B, 1)
    assert jnp.allclose(out, ref, atol=1e-4, rtol=1e-4), (out, ref)
    print("KERNEL_OK")
</pallas_src>

<mosaic_0001>
module attributes {stable_mosaic.version = 11 : i64} {
  func.func @lstm_model_kernel(%arg0: memref<64x4xf32, #tpu.memory_space<vmem>>, %arg1: memref<40x64xf32, #tpu.memory_space<vmem>>, %arg2: memref<8x1xf32, #tpu.memory_space<vmem>>) attributes {dimension_semantics = [], scalar_prefetch = 0 : i64, scratch_operands = 0 : i64, tpu.core_type = #tpu.core_type<tc>} {
    %c0 = arith.constant 0 : index
    %c0_0 = arith.constant 0 : index
    %0 = vector.load %arg1[%c0, %c0_0] : memref<40x64xf32, #tpu.memory_space<vmem>>, vector<4x64xf32>
    %c4 = arith.constant 4 : index
    %c0_1 = arith.constant 0 : index
    %1 = vector.load %arg1[%c4, %c0_1] : memref<40x64xf32, #tpu.memory_space<vmem>>, vector<16x64xf32>
    %c20 = arith.constant 20 : index
    %c0_2 = arith.constant 0 : index
    %2 = vector.load %arg1[%c20, %c0_2] : memref<40x64xf32, #tpu.memory_space<vmem>>, vector<1x64xf32>
    %c21 = arith.constant 21 : index
    %c0_3 = arith.constant 0 : index
    %3 = vector.load %arg1[%c21, %c0_3] : memref<40x64xf32, #tpu.memory_space<vmem>>, vector<16x64xf32>
    %c37 = arith.constant 37 : index
    %c0_4 = arith.constant 0 : index
    %4 = vector.load %arg1[%c37, %c0_4] : memref<40x64xf32, #tpu.memory_space<vmem>>, vector<1x64xf32>
    %c38 = arith.constant 38 : index
    %c0_5 = arith.constant 0 : index
    %5 = vector.load %arg1[%c38, %c0_5] : memref<40x64xf32, #tpu.memory_space<vmem>>, vector<1x64xf32>
    %c39 = arith.constant 39 : index
    %c0_6 = arith.constant 0 : index
    %6 = vector.load %arg1[%c39, %c0_6] : memref<40x64xf32, #tpu.memory_space<vmem>>, vector<1x1xf32>
    %c0_7 = arith.constant 0 : index
    %c0_8 = arith.constant 0 : index
    %7 = vector.load %arg0[%c0_7, %c0_8] : memref<64x4xf32, #tpu.memory_space<vmem>>, vector<64x4xf32>
    %cst = arith.constant dense<0.000000e+00> : vector<64x64xf32>
    %8 = tpu.matmul %7, %0, %cst {dimension_numbers = #tpu.dot_dimension_numbers<[1], [0], [0], [1], [0, 0, 1, 1], [], []>} : vector<64x4xf32>, vector<4x64xf32>, vector<64x64xf32> -> vector<64x64xf32>
    %9 = vector.broadcast %2 : vector<1x64xf32> to vector<64x64xf32>
    %10 = arith.addf %8, %9 : vector<64x64xf32>
    %cst_9 = arith.constant 0.000000e+00 : f32
    %11 = vector.broadcast %cst_9 : f32 to vector<8x16xf32>
    %cst_10 = arith.constant 0.000000e+00 : f32
    %12 = vector.broadcast %cst_10 : f32 to vector<8x16xf32>
    %13 = vector.extract_strided_slice %10 {offsets = [0, 0], sizes = [8, 64], strides = [1, 1]} : vector<64x64xf32> to vector<8x64xf32>
    %cst_11 = arith.constant dense<0.000000e+00> : vector<8x64xf32>
    %14 = tpu.matmul %11, %1, %cst_11 {dimension_numbers = #tpu.dot_dimension_numbers<[1], [0], [0], [1], [0, 0, 1, 1], [], []>} : vector<8x16xf32>, vector<16x64xf32>, vector<8x64xf32> -> vector<8x64xf32>
    %15 = arith.addf %13, %14 : vector<8x64xf32>
    %16 = vector.extract_strided_slice %15 {offsets = [0, 0], sizes = [8, 48], strides = [1, 1]} : vector<8x64xf32> to vector<8x48xf32>
    %17 = arith.negf %16 : vector<8x48xf32>
    %18 = math.exp %17 : vector<8x48xf32>
    %cst_12 = arith.constant 1.000000e+00 : f32
    %19 = vector.broadcast %cst_12 : f32 to vector<8x48xf32>
    %20 = arith.addf %19, %18 : vector<8x48xf32>
    %21 = arith.divf %19, %20 : vector<8x48xf32>
    %22 = vector.extract_strided_slice %15 {offsets = [0, 48], sizes = [8, 16], strides = [1, 1]} : vector<8x64xf32> to vector<8x16xf32>
    %23 = math.tanh %22 : vector<8x16xf32>
    %24 = vector.extract_strided_slice %21 {offsets = [0, 0], sizes = [8, 16], strides = [1, 1]} : vector<8x48xf32> to vector<8x16xf32>
    %25 = vector.extract_strided_slice %21 {offsets = [0, 16], sizes = [8, 16], strides = [1, 1]} : vector<8x48xf32> to vector<8x16xf32>
    %26 = vector.extract_strided_slice %21 {offsets = [0, 32], sizes = [8, 16], strides = [1, 1]} : vector<8x48xf32> to vector<8x16xf32>
    %27 = arith.mulf %25, %12 : vector<8x16xf32>
    %28 = arith.mulf %24, %23 : vector<8x16xf32>
    %29 = arith.addf %27, %28 : vector<8x16xf32>
    %30 = math.tanh %29 : vector<8x16xf32>
    %31 = arith.mulf %26, %30 : vector<8x16xf32>
    %32 = vector.extract_strided_slice %10 {offsets = [8, 0], sizes = [8, 64], strides = [1, 1]} : vector<64x64xf32> to vector<8x64xf32>
    %cst_13 = arith.constant dense<0.000000e+00> : vector<8x64xf32>
    %33 = tpu.matmul %31, %1, %cst_13 {dimension_numbers = #tpu.dot_dimension_numbers<[1], [0], [0], [1], [0, 0, 1, 1], [], []>} : vector<8x16xf32>, vector<16x64xf32>, vector<8x64xf32> -> vector<8x64xf32>
    %34 = arith.addf %32, %33 : vector<8x64xf32>
    %35 = vector.extract_strided_slice %34 {offsets = [0, 0], sizes = [8, 48], strides = [1, 1]} : vector<8x64xf32> to vector<8x48xf32>
    %36 = arith.negf %35 : vector<8x48xf32>
    %37 = math.exp %36 : vector<8x48xf32>
    %cst_14 = arith.constant 1.000000e+00 : f32
    %38 = vector.broadcast %cst_14 : f32 to vector<8x48xf32>
    %39 = arith.addf %38, %37 : vector<8x48xf32>
    %40 = arith.divf %38, %39 : vector<8x48xf32>
    %41 = vector.extract_strided_slice %34 {offsets = [0, 48], sizes = [8, 16], strides = [1, 1]} : vector<8x64xf32> to vector<8x16xf32>
    %42 = math.tanh %41 : vector<8x16xf32>
    %43 = vector.extract_strided_slice %40 {offsets = [0, 0], sizes = [8, 16], strides = [1, 1]} : vector<8x48xf32> to vector<8x16xf32>
    %44 = vector.extract_strided_slice %40 {offsets = [0, 16], sizes = [8, 16], strides = [1, 1]} : vector<8x48xf32> to vector<8x16xf32>
    %45 = vector.extract_strided_slice %40 {offsets = [0, 32], sizes = [8, 16], strides = [1, 1]} : vector<8x48xf32> to vector<8x16xf32>
    %46 = arith.mulf %44, %29 : vector<8x16xf32>
    %47 = arith.mulf %43, %42 : vector<8x16xf32>
    %48 = arith.addf %46, %47 : vector<8x16xf32>
    %49 = math.tanh %48 : vector<8x16xf32>
    %50 = arith.mulf %45, %49 : vector<8x16xf32>
    %51 = vector.extract_strided_slice %10 {offsets = [16, 0], sizes = [8, 64], strides = [1, 1]} : vector<64x64xf32> to vector<8x64xf32>
    %cst_15 = arith.constant dense<0.000000e+00> : vector<8x64xf32>
    %52 = tpu.matmul %50, %1, %cst_15 {dimension_numbers = #tpu.dot_dimension_numbers<[1], [0], [0], [1], [0, 0, 1, 1], [], []>} : vector<8x16xf32>, vector<16x64xf32>, vector<8x64xf32> -> vector<8x64xf32>
    %53 = arith.addf %51, %52 : vector<8x64xf32>
    %54 = vector.extract_strided_slice %53 {offsets = [0, 0], sizes = [8, 48], strides = [1, 1]} : vector<8x64xf32> to vector<8x48xf32>
    %55 = arith.negf %54 : vector<8x48xf32>
    %56 = math.exp %55 : vector<8x48xf32>
    %cst_16 = arith.constant 1.000000e+00 : f32
    %57 = vector.broadcast %cst_16 : f32 to vector<8x48xf32>
    %58 = arith.addf %57, %56 : vector<8x48xf32>
    %59 = arith.divf %57, %58 : vector<8x48xf32>
    %60 = vector.extract_strided_slice %53 {offsets = [0, 48], sizes = [8, 16], strides = [1, 1]} : vector<8x64xf32> to vector<8x16xf32>
    %61 = math.tanh %60 : vector<8x16xf32>
    %62 = vector.extract_strided_slice %59 {offsets = [0, 0], sizes = [8, 16], strides = [1, 1]} : vector<8x48xf32> to vector<8x16xf32>
    %63 = vector.extract_strided_slice %59 {offsets = [0, 16], sizes = [8, 16], strides = [1, 1]} : vector<8x48xf32> to vector<8x16xf32>
    %64 = vector.extract_strided_slice %59 {offsets = [0, 32], sizes = [8, 16], strides = [1, 1]} : vector<8x48xf32> to vector<8x16xf32>
    %65 = arith.mulf %63, %48 : vector<8x16xf32>
    %66 = arith.mulf %62, %61 : vector<8x16xf32>
    %67 = arith.addf %65, %66 : vector<8x16xf32>
    %68 = math.tanh %67 : vector<8x16xf32>
    %69 = arith.mulf %64, %68 : vector<8x16xf32>
    %70 = vector.extract_strided_slice %10 {offsets = [24, 0], sizes = [8, 64], strides = [1, 1]} : vector<64x64xf32> to vector<8x64xf32>
    %cst_17 = arith.constant dense<0.000000e+00> : vector<8x64xf32>
    %71 = tpu.matmul %69, %1, %cst_17 {dimension_numbers = #tpu.dot_dimension_numbers<[1], [0], [0], [1], [0, 0, 1, 1], [], []>} : vector<8x16xf32>, vector<16x64xf32>, vector<8x64xf32> -> vector<8x64xf32>
    %72 = arith.addf %70, %71 : vector<8x64xf32>
    %73 = vector.extract_strided_slice %72 {offsets = [0, 0], sizes = [8, 48], strides = [1, 1]} : vector<8x64xf32> to vector<8x48xf32>
    %74 = arith.negf %73 : vector<8x48xf32>
    %75 = math.exp %74 : vector<8x48xf32>
    %cst_18 = arith.constant 1.000000e+00 : f32
    %76 = vector.broadcast %cst_18 : f32 to vector<8x48xf32>
    %77 = arith.addf %76, %75 : vector<8x48xf32>
    %78 = arith.divf %76, %77 : vector<8x48xf32>
    %79 = vector.extract_strided_slice %72 {offsets = [0, 48], sizes = [8, 16], strides = [1, 1]} : vector<8x64xf32> to vector<8x16xf32>
    %80 = math.tanh %79 : vector<8x16xf32>
    %81 = vector.extract_strided_slice %78 {offsets = [0, 0], sizes = [8, 16], strides = [1, 1]} : vector<8x48xf32> to vector<8x16xf32>
    %82 = vector.extract_strided_slice %78 {offsets = [0, 16], sizes = [8, 16], strides = [1, 1]} : vector<8x48xf32> to vector<8x16xf32>
    %83 = vector.extract_strided_slice %78 {offsets = [0, 32], sizes = [8, 16], strides = [1, 1]} : vector<8x48xf32> to vector<8x16xf32>
    %84 = arith.mulf %82, %67 : vector<8x16xf32>
    %85 = arith.mulf %81, %80 : vector<8x16xf32>
    %86 = arith.addf %84, %85 : vector<8x16xf32>
    %87 = math.tanh %86 : vector<8x16xf32>
    %88 = arith.mulf %83, %87 : vector<8x16xf32>
    %89 = vector.extract_strided_slice %10 {offsets = [32, 0], sizes = [8, 64], strides = [1, 1]} : vector<64x64xf32> to vector<8x64xf32>
    %cst_19 = arith.constant dense<0.000000e+00> : vector<8x64xf32>
    %90 = tpu.matmul %88, %1, %cst_19 {dimension_numbers = #tpu.dot_dimension_numbers<[1], [0], [0], [1], [0, 0, 1, 1], [], []>} : vector<8x16xf32>, vector<16x64xf32>, vector<8x64xf32> -> vector<8x64xf32>
    %91 = arith.addf %89, %90 : vector<8x64xf32>
    %92 = vector.extract_strided_slice %91 {offsets = [0, 0], sizes = [8, 48], strides = [1, 1]} : vector<8x64xf32> to vector<8x48xf32>
    %93 = arith.negf %92 : vector<8x48xf32>
    %94 = math.exp %93 : vector<8x48xf32>
    %cst_20 = arith.constant 1.000000e+00 : f32
    %95 = vector.broadcast %cst_20 : f32 to vector<8x48xf32>
    %96 = arith.addf %95, %94 : vector<8x48xf32>
    %97 = arith.divf %95, %96 : vector<8x48xf32>
    %98 = vector.extract_strided_slice %91 {offsets = [0, 48], sizes = [8, 16], strides = [1, 1]} : vector<8x64xf32> to vector<8x16xf32>
    %99 = math.tanh %98 : vector<8x16xf32>
    %100 = vector.extract_strided_slice %97 {offsets = [0, 0], sizes = [8, 16], strides = [1, 1]} : vector<8x48xf32> to vector<8x16xf32>
    %101 = vector.extract_strided_slice %97 {offsets = [0, 16], sizes = [8, 16], strides = [1, 1]} : vector<8x48xf32> to vector<8x16xf32>
    %102 = vector.extract_strided_slice %97 {offsets = [0, 32], sizes = [8, 16], strides = [1, 1]} : vector<8x48xf32> to vector<8x16xf32>
    %103 = arith.mulf %101, %86 : vector<8x16xf32>
    %104 = arith.mulf %100, %99 : vector<8x16xf32>
    %105 = arith.addf %103, %104 : vector<8x16xf32>
    %106 = math.tanh %105 : vector<8x16xf32>
    %107 = arith.mulf %102, %106 : vector<8x16xf32>
    %108 = vector.extract_strided_slice %10 {offsets = [40, 0], sizes = [8, 64], strides = [1, 1]} : vector<64x64xf32> to vector<8x64xf32>
    %cst_21 = arith.constant dense<0.000000e+00> : vector<8x64xf32>
    %109 = tpu.matmul %107, %1, %cst_21 {dimension_numbers = #tpu.dot_dimension_numbers<[1], [0], [0], [1], [0, 0, 1, 1], [], []>} : vector<8x16xf32>, vector<16x64xf32>, vector<8x64xf32> -> vector<8x64xf32>
    %110 = arith.addf %108, %109 : vector<8x64xf32>
    %111 = vector.extract_strided_slice %110 {offsets = [0, 0], sizes = [8, 48], strides = [1, 1]} : vector<8x64xf32> to vector<8x48xf32>
    %112 = arith.negf %111 : vector<8x48xf32>
    %113 = math.exp %112 : vector<8x48xf32>
    %cst_22 = arith.constant 1.000000e+00 : f32
    %114 = vector.broadcast %cst_22 : f32 to vector<8x48xf32>
    %115 = arith.addf %114, %113 : vector<8x48xf32>
    %116 = arith.divf %114, %115 : vector<8x48xf32>
    %117 = vector.extract_strided_slice %110 {offsets = [0, 48], sizes = [8, 16], strides = [1, 1]} : vector<8x64xf32> to vector<8x16xf32>
    %118 = math.tanh %117 : vector<8x16xf32>
    %119 = vector.extract_strided_slice %116 {offsets = [0, 0], sizes = [8, 16], strides = [1, 1]} : vector<8x48xf32> to vector<8x16xf32>
    %120 = vector.extract_strided_slice %116 {offsets = [0, 16], sizes = [8, 16], strides = [1, 1]} : vector<8x48xf32> to vector<8x16xf32>
    %121 = vector.extract_strided_slice %116 {offsets = [0, 32], sizes = [8, 16], strides = [1, 1]} : vector<8x48xf32> to vector<8x16xf32>
    %122 = arith.mulf %120, %105 : vector<8x16xf32>
    %123 = arith.mulf %119, %118 : vector<8x16xf32>
    %124 = arith.addf %122, %123 : vector<8x16xf32>
    %125 = math.tanh %124 : vector<8x16xf32>
    %126 = arith.mulf %121, %125 : vector<8x16xf32>
    %127 = vector.extract_strided_slice %10 {offsets = [48, 0], sizes = [8, 64], strides = [1, 1]} : vector<64x64xf32> to vector<8x64xf32>
    %cst_23 = arith.constant dense<0.000000e+00> : vector<8x64xf32>
    %128 = tpu.matmul %126, %1, %cst_23 {dimension_numbers = #tpu.dot_dimension_numbers<[1], [0], [0], [1], [0, 0, 1, 1], [], []>} : vector<8x16xf32>, vector<16x64xf32>, vector<8x64xf32> -> vector<8x64xf32>
    %129 = arith.addf %127, %128 : vector<8x64xf32>
    %130 = vector.extract_strided_slice %129 {offsets = [0, 0], sizes = [8, 48], strides = [1, 1]} : vector<8x64xf32> to vector<8x48xf32>
    %131 = arith.negf %130 : vector<8x48xf32>
    %132 = math.exp %131 : vector<8x48xf32>
    %cst_24 = arith.constant 1.000000e+00 : f32
    %133 = vector.broadcast %cst_24 : f32 to vector<8x48xf32>
    %134 = arith.addf %133, %132 : vector<8x48xf32>
    %135 = arith.divf %133, %134 : vector<8x48xf32>
    %136 = vector.extract_strided_slice %129 {offsets = [0, 48], sizes = [8, 16], strides = [1, 1]} : vector<8x64xf32> to vector<8x16xf32>
    %137 = math.tanh %136 : vector<8x16xf32>
    %138 = vector.extract_strided_slice %135 {offsets = [0, 0], sizes = [8, 16], strides = [1, 1]} : vector<8x48xf32> to vector<8x16xf32>
    %139 = vector.extract_strided_slice %135 {offsets = [0, 16], sizes = [8, 16], strides = [1, 1]} : vector<8x48xf32> to vector<8x16xf32>
    %140 = vector.extract_strided_slice %135 {offsets = [0, 32], sizes = [8, 16], strides = [1, 1]} : vector<8x48xf32> to vector<8x16xf32>
    %141 = arith.mulf %139, %124 : vector<8x16xf32>
    %142 = arith.mulf %138, %137 : vector<8x16xf32>
    %143 = arith.addf %141, %142 : vector<8x16xf32>
    %144 = math.tanh %143 : vector<8x16xf32>
    %145 = arith.mulf %140, %144 : vector<8x16xf32>
    %146 = vector.extract_strided_slice %10 {offsets = [56, 0], sizes = [8, 64], strides = [1, 1]} : vector<64x64xf32> to vector<8x64xf32>
    %cst_25 = arith.constant dense<0.000000e+00> : vector<8x64xf32>
    %147 = tpu.matmul %145, %1, %cst_25 {dimension_numbers = #tpu.dot_dimension_numbers<[1], [0], [0], [1], [0, 0, 1, 1], [], []>} : vector<8x16xf32>, vector<16x64xf32>, vector<8x64xf32> -> vector<8x64xf32>
    %148 = arith.addf %146, %147 : vector<8x64xf32>
    %149 = vector.extract_strided_slice %148 {offsets = [0, 0], sizes = [8, 48], strides = [1, 1]} : vector<8x64xf32> to vector<8x48xf32>
    %150 = arith.negf %149 : vector<8x48xf32>
    %151 = math.exp %150 : vector<8x48xf32>
    %cst_26 = arith.constant 1.000000e+00 : f32
    %152 = vector.broadcast %cst_26 : f32 to vector<8x48xf32>
    %153 = arith.addf %152, %151 : vector<8x48xf32>
    %154 = arith.divf %152, %153 : vector<8x48xf32>
    %155 = vector.extract_strided_slice %148 {offsets = [0, 48], sizes = [8, 16], strides = [1, 1]} : vector<8x64xf32> to vector<8x16xf32>
    %156 = math.tanh %155 : vector<8x16xf32>
    %157 = vector.extract_strided_slice %154 {offsets = [0, 0], sizes = [8, 16], strides = [1, 1]} : vector<8x48xf32> to vector<8x16xf32>
    %158 = vector.extract_strided_slice %154 {offsets = [0, 16], sizes = [8, 16], strides = [1, 1]} : vector<8x48xf32> to vector<8x16xf32>
    %159 = vector.extract_strided_slice %154 {offsets = [0, 32], sizes = [8, 16], strides = [1, 1]} : vector<8x48xf32> to vector<8x16xf32>
    %160 = arith.mulf %158, %143 : vector<8x16xf32>
    %161 = arith.mulf %157, %156 : vector<8x16xf32>
    %162 = arith.addf %160, %161 : vector<8x16xf32>
    %163 = math.tanh %162 : vector<8x16xf32>
    %164 = arith.mulf %159, %163 : vector<8x16xf32>
    %cst_27 = arith.constant dense<0.000000e+00> : vector<8x64xf32>
    %165 = tpu.matmul %164, %3, %cst_27 {dimension_numbers = #tpu.dot_dimension_numbers<[1], [0], [0], [1], [0, 0, 1, 1], [], []>} : vector<8x16xf32>, vector<16x64xf32>, vector<8x64xf32> -> vector<8x64xf32>
    %166 = vector.broadcast %4 : vector<1x64xf32> to vector<8x64xf32>
    %167 = arith.addf %165, %166 : vector<8x64xf32>
    %cst_28 = arith.constant 0.000000e+00 : f32
    %168 = vector.broadcast %cst_28 : f32 to vector<8x64xf32>
    %169 = arith.maximumf %167, %168 : vector<8x64xf32>
    %170 = vector.broadcast %5 : vector<1x64xf32> to vector<8x64xf32>
    %171 = arith.mulf %169, %170 : vector<8x64xf32>
    %cst_29 = arith.constant dense<0.000000e+00> : vector<8xf32>
    %172 = vector.multi_reduction <add>, %171, %cst_29 [1] : vector<8x64xf32> to vector<8xf32>
    %173 = vector.shape_cast %172 : vector<8xf32> to vector<8x1xf32>
    %174 = vector.broadcast %6 : vector<1x1xf32> to vector<8x1xf32>
    %175 = arith.addf %173, %174 : vector<8x1xf32>
    %c0_30 = arith.constant 0 : index
    %c0_31 = arith.constant 0 : index
    %176 = vector.load %arg2[%c0_30, %c0_31] : memref<8x1xf32, #tpu.memory_space<vmem>>, vector<8x1xf32>
    tpu.vector_store %arg2[%c0_30, %c0_31], %175 {strides = array<i32>} : memref<8x1xf32, #tpu.memory_space<vmem>>, vector<8x1xf32>,
    return
  }
}

</mosaic_0001>

<llo_original>
// kernel: lstm_model_forward.1
$region0: #{lstm_model_forward.1}
  #allocation0 [shape = 'u32[]', space=smem, size = 0x4, offset = 0x4, fixed_abs, tag = 'smem constant byte address 0x4 - core index']
  #allocation1 [shape = 'u32[144,128]{1,0:T(1,128)}', space=vmem, size = 0x12000, scoped, tag = 'internal scratch']
  %s0 = inlined_call_operand.vmem [shape: f32[64,4], index: 0, kind: input, shape index: {}]
  %s1 = inlined_call_operand.vmem [shape: f32[40,64], index: 1, kind: input, shape index: {}]
  %s2 = inlined_call_operand.vmem [shape: f32[8,1], index: 2, kind: output, shape index: {}]
  %s3 = sld [smem:[#allocation0]]
  $region18: #{lstm_model_forward.1} parent=0
    _
  %s5 = ssub.s32 1, %s3
  %s6 = scalar_select 0, %s5, %s3
  // Predicated region
  $region2: #{lstm_model_forward.1} parent=0 // pred_check
    _
  $region3: #{lstm_model_forward.1} parent=0 // pred_check_branch
    %8 = sbr.rel (0) target = $region5
  $region4: #{lstm_model_forward.1} parent=0 // pred_region
    _
  $region5: #{lstm_model_forward.1} parent=0 // pred_fallthru
    _
  // Predicated region
  $region6: #{lstm_model_forward.1} parent=0 // pred_check
    _
  $region7: #{lstm_model_forward.1} parent=0 // pred_check_branch
    %10 = sbr.rel (0) target = $region9
  $region8: #{lstm_model_forward.1} parent=0 // pred_region
    _
  $region9: #{lstm_model_forward.1} parent=0 // pred_fallthru
    _
  %v11 = vld [vmem:[%s1] sm:$0xf]
  %v12 = vld [vmem:[%s1 + $0x4] sm:$0xff]
  %v13 = vld [vmem:[%s1 + $0xc] sm:$0xff]
  %v14 = vld [vmem:[%s1 + $0x14] sm:$0x1]
  %v15 = vld [vmem:[%s1 + $0x15] sm:$0xff]
  %v16 = vld [vmem:[%s1 + $0x1d] sm:$0xff]
  %v17 = vld [vmem:[%s1 + $0x25] sm:$0x1]
  %v18 = vld [vmem:[%s1 + $0x26] sm:$0x1]
  %v19 = vld [vmem:[%s1 + $0x27] sm:$0x1]
  %v20 = vld [vmem:[%s0] sm:$0xff]
  %v21 = vld [vmem:[%s0 + $0x8] sm:$0xff]
  %v22 = vld [vmem:[%s0 + $0x10] sm:$0xff]
  %v23 = vld [vmem:[%s0 + $0x18] sm:$0xff]
  %v24 = vld [vmem:[%s0 + $0x20] sm:$0xff]
  %v25 = vld [vmem:[%s0 + $0x28] sm:$0xff]
  %v26 = vld [vmem:[%s0 + $0x30] sm:$0xff]
  %v27 = vld [vmem:[%s0 + $0x38] sm:$0xff]
  %v28 = vlaneseq
  %v29 = vshrl.u32 %v28, 7
  %v30 = vsub.s32 0, %v29
  %v31 = vrot.slane %v14, %v30
  %vm32 = vcmask 31744
  %v34 = vsel %vm32, %v20, 0
  %v37 = vsel %vm32, %v21, 0
  %v40 = vsel %vm32, %v22, 0
  %v43 = vsel %vm32, %v23, 0
  %v46 = vsel %vm32, %v24, 0
  %v49 = vsel %vm32, %v25, 0
  %v52 = vsel %vm32, %v26, 0
  %v55 = vsel %vm32, %v27, 0
  %vm57 = vcmask 1043456
  %v59 = vsel %vm57, %v11, 0
  %61 = vmatprep.subr.mxu0 0.0
  %62 = vmatpush1.msra.mxu0 0.0
  %63 = vmatprep.subr.mxu0 0.0
  %64 = vmatpush1.msra.mxu0 0.0
  %65 = vmatprep.subr.mxu0 0.0
  %66 = vmatpush1.msra.mxu0 0.0
  %67 = vmatprep.subr.mxu0 0.0
  %68 = vmatpush1.msra.mxu0 0.0
  %69 = vmatprep.subr.mxu0 0.0
  %70 = vmatpush1.msra.mxu0 0.0
  %71 = vmatprep.subr.mxu0 0.0
  %72 = vmatpush1.msra.mxu0 0.0
  %73 = vmatprep.subr.mxu0 0.0
  %74 = vmatpush1.msra.mxu0 0.0
  %75 = vmatprep.subr.mxu0 0.0
  %76 = vmatpush1.msra.mxu0 0.0
  %77 = vmatprep.subr.mxu0 0.0
  %78 = vmatpush1.msra.mxu0 0.0
  %79 = vmatprep.subr.mxu0 0.0
  %80 = vmatpush1.msra.mxu0 0.0
  %81 = vmatprep.subr.mxu0 0.0
  %82 = vmatpush1.msra.mxu0 0.0
  %83 = vmatprep.subr.mxu0 0.0
  %84 = vmatpush1.msra.mxu0 0.0
  %85 = vmatprep.subr.mxu0 0.0
  %86 = vmatpush1.msra.mxu0 0.0
  %87 = vmatprep.subr.mxu0 0.0
  %88 = vmatpush1.msra.mxu0 0.0
  %89 = vmatprep.subr.mxu0 0.0
  %90 = vmatpush1.msra.mxu0 0.0
  %91 = vmatprep.subr.mxu0 0.0
  %92 = vmatpush1.msra.mxu0 %v59
  %93 = vmatprep.subr.mxu0 0.0
  %94 = vmatpush2.msra.mxu0 0.0
  %95 = vmatprep.subr.mxu0 0.0
  %96 = vmatpush2.msra.mxu0 0.0
  %97 = vmatprep.subr.mxu0 0.0
  %98 = vmatpush2.msra.mxu0 0.0
  %99 = vmatprep.subr.mxu0 0.0
  %100 = vmatpush2.msra.mxu0 0.0
  %101 = vmatprep.subr.mxu0 0.0
  %102 = vmatpush2.msra.mxu0 0.0
  %103 = vmatprep.subr.mxu0 0.0
  %104 = vmatpush2.msra.mxu0 0.0
  %105 = vmatprep.subr.mxu0 0.0
  %106 = vmatpush2.msra.mxu0 0.0
  %107 = vmatprep.subr.mxu0 0.0
  %108 = vmatpush2.msra.mxu0 0.0
  %109 = vmatprep.subr.mxu0 0.0
  %110 = vmatpush2.msra.mxu0 0.0
  %111 = vmatprep.subr.mxu0 0.0
  %112 = vmatpush2.msra.mxu0 0.0
  %113 = vmatprep.subr.mxu0 0.0
  %114 = vmatpush2.msra.mxu0 0.0
  %115 = vmatprep.subr.mxu0 0.0
  %116 = vmatpush2.msra.mxu0 0.0
  %117 = vmatprep.subr.mxu0 0.0
  %118 = vmatpush2.msra.mxu0 0.0
  %119 = vmatprep.subr.mxu0 0.0
  %120 = vmatpush2.msra.mxu0 0.0
  %121 = vmatprep.subr.mxu0 0.0
  %122 = vmatpush2.msra.mxu0 0.0
  %123 = vmatprep.subr.mxu0 0.0
  %124 = vmatpush2.msra.mxu0 0.0
  %125 = vmatprep.mubr.f32.mxu0 0.0
  %126 = vmatmul.mubr.f32.gmra.mxu0 %v34
  %v127 = vpop.f32.mrf.mxu0
  %v128 = vadd.f32 %v31, %v127
  %v129 = vpop.f32.mrf.mxu0
  %130 = vmatprep.mubr.f32.mxu0 0.0
  %131 = vmatmul.mubr.f32.gmra.mxu0 %v37
  %v132 = vpop.f32.mrf.mxu0
  %v133 = vadd.f32 %v31, %v132
  %v134 = vpop.f32.mrf.mxu0
  %135 = vmatprep.mubr.f32.mxu0 0.0
  %136 = vmatmul.mubr.f32.gmra.mxu0 %v40
  %v137 = vpop.f32.mrf.mxu0
  %v138 = vadd.f32 %v31, %v137
  %v139 = vpop.f32.mrf.mxu0
  %140 = vmatprep.mubr.f32.mxu0 0.0
  %141 = vmatmul.mubr.f32.gmra.mxu0 %v43
  %v142 = vpop.f32.mrf.mxu0
  %v143 = vadd.f32 %v31, %v142
  %v144 = vpop.f32.mrf.mxu0
  %145 = vmatprep.mubr.f32.mxu0 0.0
  %146 = vmatmul.mubr.f32.gmra.mxu0 %v46
  %v147 = vpop.f32.mrf.mxu0
  %v148 = vadd.f32 %v31, %v147
  %v149 = vpop.f32.mrf.mxu0
  %150 = vmatprep.mubr.f32.mxu0 0.0
  %151 = vmatmul.mubr.f32.gmra.mxu0 %v49
  %v152 = vpop.f32.mrf.mxu0
  %v153 = vadd.f32 %v31, %v152
  %v154 = vpop.f32.mrf.mxu0
  %155 = vmatprep.mubr.f32.mxu0 0.0
  %156 = vmatmul.mubr.f32.gmra.mxu0 %v52
  %v157 = vpop.f32.mrf.mxu0
  %v158 = vadd.f32 %v31, %v157
  %v159 = vpop.f32.mrf.mxu0
  %160 = vmatprep.mubr.f32.mxu0 0.0
  %161 = vmatmul.mubr.f32.gmra.mxu0 %v55
  %v162 = vpop.f32.mrf.mxu0
  %v163 = vadd.f32 %v31, %v162
  %v164 = vpop.f32.mrf.mxu0
  %165 = vdwg.mxu0
  %vm166 = vcmask 130048
  %v168 = vsel %vm166, 0.0, 0
  %170 = vmatprep.subr.mxu0 0.0
  %171 = vmatpush1.msra.mxu0 0.0
  %172 = vmatprep.subr.mxu0 0.0
  %173 = vmatpush1.msra.mxu0 0.0
  %174 = vmatprep.subr.mxu0 0.0
  %175 = vmatpush1.msra.mxu0 0.0
  %176 = vmatprep.subr.mxu0 0.0
  %177 = vmatpush1.msra.mxu0 0.0
  %178 = vmatprep.subr.mxu0 0.0
  %179 = vmatpush1.msra.mxu0 0.0
  %180 = vmatprep.subr.mxu0 0.0
  %181 = vmatpush1.msra.mxu0 0.0
  %182 = vmatprep.subr.mxu0 0.0
  %183 = vmatpush1.msra.mxu0 0.0
  %184 = vmatprep.subr.mxu0 0.0
  %185 = vmatpush1.msra.mxu0 0.0
  %186 = vmatprep.subr.mxu0 0.0
  %187 = vmatpush1.msra.mxu0 0.0
  %188 = vmatprep.subr.mxu0 0.0
  %189 = vmatpush1.msra.mxu0 0.0
  %190 = vmatprep.subr.mxu0 0.0
  %191 = vmatpush1.msra.mxu0 0.0
  %192 = vmatprep.subr.mxu0 0.0
  %193 = vmatpush1.msra.mxu0 0.0
  %194 = vmatprep.subr.mxu0 0.0
  %195 = vmatpush1.msra.mxu0 0.0
  %196 = vmatprep.subr.mxu0 0.0
  %197 = vmatpush1.msra.mxu0 0.0
  %198 = vmatprep.subr.mxu0 0.0
  %199 = vmatpush1.msra.mxu0 %v13
  %200 = vmatprep.subr.mxu0 0.0
  %201 = vmatpush1.msra.mxu0 %v12
  %202 = vmatprep.subr.mxu0 0.0
  %203 = vmatpush2.msra.mxu0 0.0
  %204 = vmatprep.subr.mxu0 0.0
  %205 = vmatpush2.msra.mxu0 0.0
  %206 = vmatprep.subr.mxu0 0.0
  %207 = vmatpush2.msra.mxu0 0.0
  %208 = vmatprep.subr.mxu0 0.0
  %209 = vmatpush2.msra.mxu0 0.0
  %210 = vmatprep.subr.mxu0 0.0
  %211 = vmatpush2.msra.mxu0 0.0
  %212 = vmatprep.subr.mxu0 0.0
  %213 = vmatpush2.msra.mxu0 0.0
  %214 = vmatprep.subr.mxu0 0.0
  %215 = vmatpush2.msra.mxu0 0.0
  %216 = vmatprep.subr.mxu0 0.0
  %217 = vmatpush2.msra.mxu0 0.0
  %218 = vmatprep.subr.mxu0 0.0
  %219 = vmatpush2.msra.mxu0 0.0
  %220 = vmatprep.subr.mxu0 0.0
  %221 = vmatpush2.msra.mxu0 0.0
  %222 = vmatprep.subr.mxu0 0.0
  %223 = vmatpush2.msra.mxu0 0.0
  %224 = vmatprep.subr.mxu0 0.0
  %225 = vmatpush2.msra.mxu0 0.0
  %226 = vmatprep.subr.mxu0 0.0
  %227 = vmatpush2.msra.mxu0 0.0
  %228 = vmatprep.subr.mxu0 0.0
  %229 = vmatpush2.msra.mxu0 0.0
  %230 = vmatprep.subr.mxu0 0.0
  %231 = vmatpush2.msra.mxu0 0.0
  %232 = vmatprep.subr.mxu0 0.0
  %233 = vmatpush2.msra.mxu0 0.0
  %234 = vmatprep.mubr.f32.mxu0 0.0
  %235 = vmatmul.mubr.f32.gmra.mxu0 %v168
  %v236 = vpop.f32.mrf.mxu0
  %v237 = vadd.f32 0.0, %v236
  %v238 = vpop.f32.mrf.mxu0
  %239 = vdwg.mxu0
  %v240 = vadd.f32 %v128, %v237
  %v241 = vxor.u32 %v240, 2147483648
  %v242 = vmul.f32 %v241, 1.442695
  %v243 = vpow.pop %v242
  %v244 = vadd.f32 %v243, 1.0
  %v245 = vrcp.pop %v244
  %v246 = vmul.f32 1.0, %v245
  %v247 = vtanh.pop %v240
  %v248 = vmul.f32 %v246, 0.0
  %250 = vrot.lane.b32.xlu0 %v247, 80
  %v251 = vpop.permute.xlu0 %250
  %v253 = vmul.f32 %v246, %v251
  %255 = vrot.lane.b32.xlu0 %v253, 16
  %v256 = vpop.permute.xlu0 %255
  %v258 = vadd.f32 %v248, %v256
  %v259 = vtanh.pop %v258
  %261 = vrot.lane.b32.xlu0 %v259, 16
  %v262 = vpop.permute.xlu0 %261
  %v264 = vmul.f32 %v246, %v262
  %266 = vrot.lane.b32.xlu0 %v264, 96
  %v267 = vpop.permute.xlu0 %266
  %v268 = vsel %vm166, %v267, 0
  %270 = vmatprep.subr.mxu0 0.0
  %271 = vmatpush1.msra.mxu0 0.0
  %272 = vmatprep.subr.mxu0 0.0
  %273 = vmatpush1.msra.mxu0 0.0
  %274 = vmatprep.subr.mxu0 0.0
  %275 = vmatpush1.msra.mxu0 0.0
  %276 = vmatprep.subr.mxu0 0.0
  %277 = vmatpush1.msra.mxu0 0.0
  %278 = vmatprep.subr.mxu0 0.0
  %279 = vmatpush1.msra.mxu0 0.0
  %280 = vmatprep.subr.mxu0 0.0
  %281 = vmatpush1.msra.mxu0 0.0
  %282 = vmatprep.subr.mxu0 0.0
  %283 = vmatpush1.msra.mxu0 0.0
  %284 = vmatprep.subr.mxu0 0.0
  %285 = vmatpush1.msra.mxu0 0.0
  %286 = vmatprep.subr.mxu0 0.0
  %287 = vmatpush1.msra.mxu0 0.0
  %288 = vmatprep.subr.mxu0 0.0
  %289 = vmatpush1.msra.mxu0 0.0
  %290 = vmatprep.subr.mxu0 0.0
  %291 = vmatpush1.msra.mxu0 0.0
  %292 = vmatprep.subr.mxu0 0.0
  %293 = vmatpush1.msra.mxu0 0.0
  %294 = vmatprep.subr.mxu0 0.0
  %295 = vmatpush1.msra.mxu0 0.0
  %296 = vmatprep.subr.mxu0 0.0
  %297 = vmatpush1.msra.mxu0 0.0
  %298 = vmatprep.subr.mxu0 0.0
  %299 = vmatpush1.msra.mxu0 %v13
  %300 = vmatprep.subr.mxu0 0.0
  %301 = vmatpush1.msra.mxu0 %v12
  %302 = vmatprep.subr.mxu0 0.0
  %303 = vmatpush2.msra.mxu0 0.0
  %304 = vmatprep.subr.mxu0 0.0
  %305 = vmatpush2.msra.mxu0 0.0
  %306 = vmatprep.subr.mxu0 0.0
  %307 = vmatpush2.msra.mxu0 0.0
  %308 = vmatprep.subr.mxu0 0.0
  %309 = vmatpush2.msra.mxu0 0.0
  %310 = vmatprep.subr.mxu0 0.0
  %311 = vmatpush2.msra.mxu0 0.0
  %312 = vmatprep.subr.mxu0 0.0
  %313 = vmatpush2.msra.mxu0 0.0
  %314 = vmatprep.subr.mxu0 0.0
  %315 = vmatpush2.msra.mxu0 0.0
  %316 = vmatprep.subr.mxu0 0.0
  %317 = vmatpush2.msra.mxu0 0.0
  %318 = vmatprep.subr.mxu0 0.0
  %319 = vmatpush2.msra.mxu0 0.0
  %320 = vmatprep.subr.mxu0 0.0
  %321 = vmatpush2.msra.mxu0 0.0
  %322 = vmatprep.subr.mxu0 0.0
  %323 = vmatpush2.msra.mxu0 0.0
  %324 = vmatprep.subr.mxu0 0.0
  %325 = vmatpush2.msra.mxu0 0.0
  %326 = vmatprep.subr.mxu0 0.0
  %327 = vmatpush2.msra.mxu0 0.0
  %328 = vmatprep.subr.mxu0 0.0
  %329 = vmatpush2.msra.mxu0 0.0
  %330 = vmatprep.subr.mxu0 0.0
  %331 = vmatpush2.msra.mxu0 0.0
  %332 = vmatprep.subr.mxu0 0.0
  %333 = vmatpush2.msra.mxu0 0.0
  %334 = vmatprep.mubr.f32.mxu0 0.0
  %335 = vmatmul.mubr.f32.gmra.mxu0 %v268
  %v336 = vpop.f32.mrf.mxu0
  %v337 = vadd.f32 0.0, %v336
  %v338 = vpop.f32.mrf.mxu0
  %339 = vdwg.mxu0
  %v340 = vadd.f32 %v133, %v337
  %v341 = vxor.u32 %v340, 2147483648
  %v342 = vmul.f32 %v341, 1.442695
  %v343 = vpow.pop %v342
  %v344 = vadd.f32 %v343, 1.0
  %v345 = vrcp.pop %v344
  %v346 = vmul.f32 1.0, %v345
  %v347 = vtanh.pop %v340
  %v348 = vmul.f32 %v346, %v258
  %350 = vrot.lane.b32.xlu0 %v347, 80
  %v351 = vpop.permute.xlu0 %350
  %v353 = vmul.f32 %v346, %v351
  %355 = vrot.lane.b32.xlu0 %v353, 16
  %v356 = vpop.permute.xlu0 %355
  %v358 = vadd.f32 %v348, %v356
  %v359 = vtanh.pop %v358
  %361 = vrot.lane.b32.xlu0 %v359, 16
  %v362 = vpop.permute.xlu0 %361
  %v364 = vmul.f32 %v346, %v362
  %366 = vrot.lane.b32.xlu0 %v364, 96
  %v367 = vpop.permute.xlu0 %366
  %v368 = vsel %vm166, %v367, 0
  %370 = vmatprep.subr.mxu0 0.0
  %371 = vmatpush1.msra.mxu0 0.0
  %372 = vmatprep.subr.mxu0 0.0
  %373 = vmatpush1.msra.mxu0 0.0
  %374 = vmatprep.subr.mxu0 0.0
  %375 = vmatpush1.msra.mxu0 0.0
  %376 = vmatprep.subr.mxu0 0.0
  %377 = vmatpush1.msra.mxu0 0.0
  %378 = vmatprep.subr.mxu0 0.0
  %379 = vmatpush1.msra.mxu0 0.0
  %380 = vmatprep.subr.mxu0 0.0
  %381 = vmatpush1.msra.mxu0 0.0
  %382 = vmatprep.subr.mxu0 0.0
  %383 = vmatpush1.msra.mxu0 0.0
  %384 = vmatprep.subr.mxu0 0.0
  %385 = vmatpush1.msra.mxu0 0.0
  %386 = vmatprep.subr.mxu0 0.0
  %387 = vmatpush1.msra.mxu0 0.0
  %388 = vmatprep.subr.mxu0 0.0
  %389 = vmatpush1.msra.mxu0 0.0
  %390 = vmatprep.subr.mxu0 0.0
  %391 = vmatpush1.msra.mxu0 0.0
  %392 = vmatprep.subr.mxu0 0.0
  %393 = vmatpush1.msra.mxu0 0.0
  %394 = vmatprep.subr.mxu0 0.0
  %395 = vmatpush1.msra.mxu0 0.0
  %396 = vmatprep.subr.mxu0 0.0
  %397 = vmatpush1.msra.mxu0 0.0
  %398 = vmatprep.subr.mxu0 0.0
  %399 = vmatpush1.msra.mxu0 %v13
  %400 = vmatprep.subr.mxu0 0.0
  %401 = vmatpush1.msra.mxu0 %v12
  %402 = vmatprep.subr.mxu0 0.0
  %403 = vmatpush2.msra.mxu0 0.0
  %404 = vmatprep.subr.mxu0 0.0
  %405 = vmatpush2.msra.mxu0 0.0
  %406 = vmatprep.subr.mxu0 0.0
  %407 = vmatpush2.msra.mxu0 0.0
  %408 = vmatprep.subr.mxu0 0.0
  %409 = vmatpush2.msra.mxu0 0.0
  %410 = vmatprep.subr.mxu0 0.0
  %411 = vmatpush2.msra.mxu0 0.0
  %412 = vmatprep.subr.mxu0 0.0
  %413 = vmatpush2.msra.mxu0 0.0
  %414 = vmatprep.subr.mxu0 0.0
  %415 = vmatpush2.msra.mxu0 0.0
  %416 = vmatprep.subr.mxu0 0.0
  %417 = vmatpush2.msra.mxu0 0.0
  %418 = vmatprep.subr.mxu0 0.0
  %419 = vmatpush2.msra.mxu0 0.0
  %420 = vmatprep.subr.mxu0 0.0
  %421 = vmatpush2.msra.mxu0 0.0
  %422 = vmatprep.subr.mxu0 0.0
  %423 = vmatpush2.msra.mxu0 0.0
  %424 = vmatprep.subr.mxu0 0.0
  %425 = vmatpush2.msra.mxu0 0.0
  %426 = vmatprep.subr.mxu0 0.0
  %427 = vmatpush2.msra.mxu0 0.0
  %428 = vmatprep.subr.mxu0 0.0
  %429 = vmatpush2.msra.mxu0 0.0
  %430 = vmatprep.subr.mxu0 0.0
  %431 = vmatpush2.msra.mxu0 0.0
  %432 = vmatprep.subr.mxu0 0.0
  %433 = vmatpush2.msra.mxu0 0.0
  %434 = vmatprep.mubr.f32.mxu0 0.0
  %435 = vmatmul.mubr.f32.gmra.mxu0 %v368
  %v436 = vpop.f32.mrf.mxu0
  %v437 = vadd.f32 0.0, %v436
  %v438 = vpop.f32.mrf.mxu0
  %439 = vdwg.mxu0
  %v440 = vadd.f32 %v138, %v437
  %v441 = vxor.u32 %v440, 2147483648
  %v442 = vmul.f32 %v441, 1.442695
  %v443 = vpow.pop %v442
  %v444 = vadd.f32 %v443, 1.0
  %v445 = vrcp.pop %v444
  %v446 = vmul.f32 1.0, %v445
  %v447 = vtanh.pop %v440
  %v448 = vmul.f32 %v446, %v358
  %450 = vrot.lane.b32.xlu0 %v447, 80
  %v451 = vpop.permute.xlu0 %450
  %v453 = vmul.f32 %v446, %v451
  %455 = vrot.lane.b32.xlu0 %v453, 16
  %v456 = vpop.permute.xlu0 %455
  %v458 = vadd.f32 %v448, %v456
  %v459 = vtanh.pop %v458
  %461 = vrot.lane.b32.xlu0 %v459, 16
  %v462 = vpop.permute.xlu0 %461
  %v464 = vmul.f32 %v446, %v462
  %466 = vrot.lane.b32.xlu0 %v464, 96
  %v467 = vpop.permute.xlu0 %466
  %v468 = vsel %vm166, %v467, 0
  %470 = vmatprep.subr.mxu0 0.0
  %471 = vmatpush1.msra.mxu0 0.0
  %472 = vmatprep.subr.mxu0 0.0
  %473 = vmatpush1.msra.mxu0 0.0
  %474 = vmatprep.subr.mxu0 0.0
  %475 = vmatpush1.msra.mxu0 0.0
  %476 = vmatprep.subr.mxu0 0.0
  %477 = vmatpush1.msra.mxu0 0.0
  %478 = vmatprep.subr.mxu0 0.0
  %479 = vmatpush1.msra.mxu0 0.0
  %480 = vmatprep.subr.mxu0 0.0
  %481 = vmatpush1.msra.mxu0 0.0
  %482 = vmatprep.subr.mxu0 0.0
  %483 = vmatpush1.msra.mxu0 0.0
  %484 = vmatprep.subr.mxu0 0.0
  %485 = vmatpush1.msra.mxu0 0.0
  %486 = vmatprep.subr.mxu0 0.0
  %487 = vmatpush1.msra.mxu0 0.0
  %488 = vmatprep.subr.mxu0 0.0
  %489 = vmatpush1.msra.mxu0 0.0
  %490 = vmatprep.subr.mxu0 0.0
  %491 = vmatpush1.msra.mxu0 0.0
  %492 = vmatprep.subr.mxu0 0.0
  %493 = vmatpush1.msra.mxu0 0.0
  %494 = vmatprep.subr.mxu0 0.0
  %495 = vmatpush1.msra.mxu0 0.0
  %496 = vmatprep.subr.mxu0 0.0
  %497 = vmatpush1.msra.mxu0 0.0
  %498 = vmatprep.subr.mxu0 0.0
  %499 = vmatpush1.msra.mxu0 %v13
  %500 = vmatprep.subr.mxu0 0.0
  %501 = vmatpush1.msra.mxu0 %v12
  %502 = vmatprep.subr.mxu0 0.0
  %503 = vmatpush2.msra.mxu0 0.0
  %504 = vmatprep.subr.mxu0 0.0
  %505 = vmatpush2.msra.mxu0 0.0
  %506 = vmatprep.subr.mxu0 0.0
  %507 = vmatpush2.msra.mxu0 0.0
  %508 = vmatprep.subr.mxu0 0.0
  %509 = vmatpush2.msra.mxu0 0.0
  %510 = vmatprep.subr.mxu0 0.0
  %511 = vmatpush2.msra.mxu0 0.0
  %512 = vmatprep.subr.mxu0 0.0
  %513 = vmatpush2.msra.mxu0 0.0
  %514 = vmatprep.subr.mxu0 0.0
  %515 = vmatpush2.msra.mxu0 0.0
  %516 = vmatprep.subr.mxu0 0.0
  %517 = vmatpush2.msra.mxu0 0.0
  %518 = vmatprep.subr.mxu0 0.0
  %519 = vmatpush2.msra.mxu0 0.0
  %520 = vmatprep.subr.mxu0 0.0
  %521 = vmatpush2.msra.mxu0 0.0
  %522 = vmatprep.subr.mxu0 0.0
  %523 = vmatpush2.msra.mxu0 0.0
  %524 = vmatprep.subr.mxu0 0.0
  %525 = vmatpush2.msra.mxu0 0.0
  %526 = vmatprep.subr.mxu0 0.0
  %527 = vmatpush2.msra.mxu0 0.0
  %528 = vmatprep.subr.mxu0 0.0
  %529 = vmatpush2.msra.mxu0 0.0
  %530 = vmatprep.subr.mxu0 0.0
  %531 = vmatpush2.msra.mxu0 0.0
  %532 = vmatprep.subr.mxu0 0.0
  %533 = vmatpush2.msra.mxu0 0.0
  %534 = vmatprep.mubr.f32.mxu0 0.0
  %535 = vmatmul.mubr.f32.gmra.mxu0 %v468
  %v536 = vpop.f32.mrf.mxu0
  %v537 = vadd.f32 0.0, %v536
  %v538 = vpop.f32.mrf.mxu0
  %539 = vdwg.mxu0
  %v540 = vadd.f32 %v143, %v537
  %v541 = vxor.u32 %v540, 2147483648
  %v542 = vmul.f32 %v541, 1.442695
  %v543 = vpow.pop %v542
  %v544 = vadd.f32 %v543, 1.0
  %v545 = vrcp.pop %v544
  %v546 = vmul.f32 1.0, %v545
  %v547 = vtanh.pop %v540
  %v548 = vmul.f32 %v546, %v458
  %550 = vrot.lane.b32.xlu0 %v547, 80
  %v551 = vpop.permute.xlu0 %550
  %v553 = vmul.f32 %v546, %v551
  %555 = vrot.lane.b32.xlu0 %v553, 16
  %v556 = vpop.permute.xlu0 %555
  %v558 = vadd.f32 %v548, %v556
  %v559 = vtanh.pop %v558
  %561 = vrot.lane.b32.xlu0 %v559, 16
  %v562 = vpop.permute.xlu0 %561
  %v564 = vmul.f32 %v546, %v562
  %566 = vrot.lane.b32.xlu0 %v564, 96
  %v567 = vpop.permute.xlu0 %566
  %v568 = vsel %vm166, %v567, 0
  %570 = vmatprep.subr.mxu0 0.0
  %571 = vmatpush1.msra.mxu0 0.0
  %572 = vmatprep.subr.mxu0 0.0
  %573 = vmatpush1.msra.mxu0 0.0
  %574 = vmatprep.subr.mxu0 0.0
  %575 = vmatpush1.msra.mxu0 0.0
  %576 = vmatprep.subr.mxu0 0.0
  %577 = vmatpush1.msra.mxu0 0.0
  %578 = vmatprep.subr.mxu0 0.0
  %579 = vmatpush1.msra.mxu0 0.0
  %580 = vmatprep.subr.mxu0 0.0
  %581 = vmatpush1.msra.mxu0 0.0
  %582 = vmatprep.subr.mxu0 0.0
  %583 = vmatpush1.msra.mxu0 0.0
  %584 = vmatprep.subr.mxu0 0.0
  %585 = vmatpush1.msra.mxu0 0.0
  %586 = vmatprep.subr.mxu0 0.0
  %587 = vmatpush1.msra.mxu0 0.0
  %588 = vmatprep.subr.mxu0 0.0
  %589 = vmatpush1.msra.mxu0 0.0
  %590 = vmatprep.subr.mxu0 0.0
  %591 = vmatpush1.msra.mxu0 0.0
  %592 = vmatprep.subr.mxu0 0.0
  %593 = vmatpush1.msra.mxu0 0.0
  %594 = vmatprep.subr.mxu0 0.0
  %595 = vmatpush1.msra.mxu0 0.0
  %596 = vmatprep.subr.mxu0 0.0
  %597 = vmatpush1.msra.mxu0 0.0
  %598 = vmatprep.subr.mxu0 0.0
  %599 = vmatpush1.msra.mxu0 %v13
  %600 = vmatprep.subr.mxu0 0.0
  %601 = vmatpush1.msra.mxu0 %v12
  %602 = vmatprep.subr.mxu0 0.0
  %603 = vmatpush2.msra.mxu0 0.0
  %604 = vmatprep.subr.mxu0 0.0
  %605 = vmatpush2.msra.mxu0 0.0
  %606 = vmatprep.subr.mxu0 0.0
  %607 = vmatpush2.msra.mxu0 0.0
  %608 = vmatprep.subr.mxu0 0.0
  %609 = vmatpush2.msra.mxu0 0.0
  %610 = vmatprep.subr.mxu0 0.0
  %611 = vmatpush2.msra.mxu0 0.0
  %612 = vmatprep.subr.mxu0 0.0
  %613 = vmatpush2.msra.mxu0 0.0
  %614 = vmatprep.subr.mxu0 0.0
  %615 = vmatpush2.msra.mxu0 0.0
  %616 = vmatprep.subr.mxu0 0.0
  %617 = vmatpush2.msra.mxu0 0.0
  %618 = vmatprep.subr.mxu0 0.0
  %619 = vmatpush2.msra.mxu0 0.0
  %620 = vmatprep.subr.mxu0 0.0
  %621 = vmatpush2.msra.mxu0 0.0
  %622 = vmatprep.subr.mxu0 0.0
  %623 = vmatpush2.msra.mxu0 0.0
  %624 = vmatprep.subr.mxu0 0.0
  %625 = vmatpush2.msra.mxu0 0.0
  %626 = vmatprep.subr.mxu0 0.0
  %627 = vmatpush2.msra.mxu0 0.0
  %628 = vmatprep.subr.mxu0 0.0
  %629 = vmatpush2.msra.mxu0 0.0
  %630 = vmatprep.subr.mxu0 0.0
  %631 = vmatpush2.msra.mxu0 0.0
  %632 = vmatprep.subr.mxu0 0.0
  %633 = vmatpush2.msra.mxu0 0.0
  %634 = vmatprep.mubr.f32.mxu0 0.0
  %635 = vmatmul.mubr.f32.gmra.mxu0 %v568
  %v636 = vpop.f32.mrf.mxu0
  %v637 = vadd.f32 0.0, %v636
  %v638 = vpop.f32.mrf.mxu0
  %639 = vdwg.mxu0
  %v640 = vadd.f32 %v148, %v637
  %v641 = vxor.u32 %v640, 2147483648
  %v642 = vmul.f32 %v641, 1.442695
  %v643 = vpow.pop %v642
  %v644 = vadd.f32 %v643, 1.0
  %v645 = vrcp.pop %v644
  %v646 = vmul.f32 1.0, %v645
  %v647 = vtanh.pop %v640
  %v648 = vmul.f32 %v646, %v558
  %650 = vrot.lane.b32.xlu0 %v647, 80
  %v651 = vpop.permute.xlu0 %650
  %v653 = vmul.f32 %v646, %v651
  %655 = vrot.lane.b32.xlu0 %v653, 16
  %v656 = vpop.permute.xlu0 %655
  %v658 = vadd.f32 %v648, %v656
  %v659 = vtanh.pop %v658
  %661 = vrot.lane.b32.xlu0 %v659, 16
  %v662 = vpop.permute.xlu0 %661
  %v664 = vmul.f32 %v646, %v662
  %666 = vrot.lane.b32.xlu0 %v664, 96
  %v667 = vpop.permute.xlu0 %666
  %v668 = vsel %vm166, %v667, 0
  %670 = vmatprep.subr.mxu0 0.0
  %671 = vmatpush1.msra.mxu0 0.0
  %672 = vmatprep.subr.mxu0 0.0
  %673 = vmatpush1.msra.mxu0 0.0
  %674 = vmatprep.subr.mxu0 0.0
  %675 = vmatpush1.msra.mxu0 0.0
  %676 = vmatprep.subr.mxu0 0.0
  %677 = vmatpush1.msra.mxu0 0.0
  %678 = vmatprep.subr.mxu0 0.0
  %679 = vmatpush1.msra.mxu0 0.0
  %680 = vmatprep.subr.mxu0 0.0
  %681 = vmatpush1.msra.mxu0 0.0
  %682 = vmatprep.subr.mxu0 0.0
  %683 = vmatpush1.msra.mxu0 0.0
  %684 = vmatprep.subr.mxu0 0.0
  %685 = vmatpush1.msra.mxu0 0.0
  %686 = vmatprep.subr.mxu0 0.0
  %687 = vmatpush1.msra.mxu0 0.0
  %688 = vmatprep.subr.mxu0 0.0
  %689 = vmatpush1.msra.mxu0 0.0
  %690 = vmatprep.subr.mxu0 0.0
  %691 = vmatpush1.msra.mxu0 0.0
  %692 = vmatprep.subr.mxu0 0.0
  %693 = vmatpush1.msra.mxu0 0.0
  %694 = vmatprep.subr.mxu0 0.0
  %695 = vmatpush1.msra.mxu0 0.0
  %696 = vmatprep.subr.mxu0 0.0
  %697 = vmatpush1.msra.mxu0 0.0
  %698 = vmatprep.subr.mxu0 0.0
  %699 = vmatpush1.msra.mxu0 %v13
  %700 = vmatprep.subr.mxu0 0.0
  %701 = vmatpush1.msra.mxu0 %v12
  %702 = vmatprep.subr.mxu0 0.0
  %703 = vmatpush2.msra.mxu0 0.0
  %704 = vmatprep.subr.mxu0 0.0
  %705 = vmatpush2.msra.mxu0 0.0
  %706 = vmatprep.subr.mxu0 0.0
  %707 = vmatpush2.msra.mxu0 0.0
  %708 = vmatprep.subr.mxu0 0.0
  %709 = vmatpush2.msra.mxu0 0.0
  %710 = vmatprep.subr.mxu0 0.0
  %711 = vmatpush2.msra.mxu0 0.0
  %712 = vmatprep.subr.mxu0 0.0
  %713 = vmatpush2.msra.mxu0 0.0
  %714 = vmatprep.subr.mxu0 0.0
  %715 = vmatpush2.msra.mxu0 0.0
  %716 = vmatprep.subr.mxu0 0.0
  %717 = vmatpush2.msra.mxu0 0.0
  %718 = vmatprep.subr.mxu0 0.0
  %719 = vmatpush2.msra.mxu0 0.0
  %720 = vmatprep.subr.mxu0 0.0
  %721 = vmatpush2.msra.mxu0 0.0
  %722 = vmatprep.subr.mxu0 0.0
  %723 = vmatpush2.msra.mxu0 0.0
  %724 = vmatprep.subr.mxu0 0.0
  %725 = vmatpush2.msra.mxu0 0.0
  %726 = vmatprep.subr.mxu0 0.0
  %727 = vmatpush2.msra.mxu0 0.0
  %728 = vmatprep.subr.mxu0 0.0
  %729 = vmatpush2.msra.mxu0 0.0
  %730 = vmatprep.subr.mxu0 0.0
  %731 = vmatpush2.msra.mxu0 0.0
  %732 = vmatprep.subr.mxu0 0.0
  %733 = vmatpush2.msra.mxu0 0.0
  %734 = vmatprep.mubr.f32.mxu0 0.0
  %735 = vmatmul.mubr.f32.gmra.mxu0 %v668
  %v736 = vpop.f32.mrf.mxu0
  %v737 = vadd.f32 0.0, %v736
  %v738 = vpop.f32.mrf.mxu0
  %739 = vdwg.mxu0
  %v740 = vadd.f32 %v153, %v737
  %v741 = vxor.u32 %v740, 2147483648
  %v742 = vmul.f32 %v741, 1.442695
  %v743 = vpow.pop %v742
  %v744 = vadd.f32 %v743, 1.0
  %v745 = vrcp.pop %v744
  %v746 = vmul.f32 1.0, %v745
  %v747 = vtanh.pop %v740
  %v748 = vmul.f32 %v746, %v658
  %750 = vrot.lane.b32.xlu0 %v747, 80
  %v751 = vpop.permute.xlu0 %750
  %v753 = vmul.f32 %v746, %v751
  %755 = vrot.lane.b32.xlu0 %v753, 16
  %v756 = vpop.permute.xlu0 %755
  %v758 = vadd.f32 %v748, %v756
  %v759 = vtanh.pop %v758
  %761 = vrot.lane.b32.xlu0 %v759, 16
  %v762 = vpop.permute.xlu0 %761
  %v764 = vmul.f32 %v746, %v762
  %766 = vrot.lane.b32.xlu0 %v764, 96
  %v767 = vpop.permute.xlu0 %766
  %v768 = vsel %vm166, %v767, 0
  %770 = vmatprep.subr.mxu0 0.0
  %771 = vmatpush1.msra.mxu0 0.0
  %772 = vmatprep.subr.mxu0 0.0
  %773 = vmatpush1.msra.mxu0 0.0
  %774 = vmatprep.subr.mxu0 0.0
  %775 = vmatpush1.msra.mxu0 0.0
  %776 = vmatprep.subr.mxu0 0.0
  %777 = vmatpush1.msra.mxu0 0.0
  %778 = vmatprep.subr.mxu0 0.0
  %779 = vmatpush1.msra.mxu0 0.0
  %780 = vmatprep.subr.mxu0 0.0
  %781 = vmatpush1.msra.mxu0 0.0
  %782 = vmatprep.subr.mxu0 0.0
  %783 = vmatpush1.msra.mxu0 0.0
  %784 = vmatprep.subr.mxu0 0.0
  %785 = vmatpush1.msra.mxu0 0.0
  %786 = vmatprep.subr.mxu0 0.0
  %787 = vmatpush1.msra.mxu0 0.0
  %788 = vmatprep.subr.mxu0 0.0
  %789 = vmatpush1.msra.mxu0 0.0
  %790 = vmatprep.subr.mxu0 0.0
  %791 = vmatpush1.msra.mxu0 0.0
  %792 = vmatprep.subr.mxu0 0.0
  %793 = vmatpush1.msra.mxu0 0.0
  %794 = vmatprep.subr.mxu0 0.0
  %795 = vmatpush1.msra.mxu0 0.0
  %796 = vmatprep.subr.mxu0 0.0
  %797 = vmatpush1.msra.mxu0 0.0
  %798 = vmatprep.subr.mxu0 0.0
  %799 = vmatpush1.msra.mxu0 %v13
  %800 = vmatprep.subr.mxu0 0.0
  %801 = vmatpush1.msra.mxu0 %v12
  %802 = vmatprep.subr.mxu0 0.0
  %803 = vmatpush2.msra.mxu0 0.0
  %804 = vmatprep.subr.mxu0 0.0
  %805 = vmatpush2.msra.mxu0 0.0
  %806 = vmatprep.subr.mxu0 0.0
  %807 = vmatpush2.msra.mxu0 0.0
  %808 = vmatprep.subr.mxu0 0.0
  %809 = vmatpush2.msra.mxu0 0.0
  %810 = vmatprep.subr.mxu0 0.0
  %811 = vmatpush2.msra.mxu0 0.0
  %812 = vmatprep.subr.mxu0 0.0
  %813 = vmatpush2.msra.mxu0 0.0
  %814 = vmatprep.subr.mxu0 0.0
  %815 = vmatpush2.msra.mxu0 0.0
  %816 = vmatprep.subr.mxu0 0.0
  %817 = vmatpush2.msra.mxu0 0.0
  %818 = vmatprep.subr.mxu0 0.0
  %819 = vmatpush2.msra.mxu0 0.0
  %820 = vmatprep.subr.mxu0 0.0
  %821 = vmatpush2.msra.mxu0 0.0
  %822 = vmatprep.subr.mxu0 0.0
  %823 = vmatpush2.msra.mxu0 0.0
  %824 = vmatprep.subr.mxu0 0.0
  %825 = vmatpush2.msra.mxu0 0.0
  %826 = vmatprep.subr.mxu0 0.0
  %827 = vmatpush2.msra.mxu0 0.0
  %828 = vmatprep.subr.mxu0 0.0
  %829 = vmatpush2.msra.mxu0 0.0
  %830 = vmatprep.subr.mxu0 0.0
  %831 = vmatpush2.msra.mxu0 0.0
  %832 = vmatprep.subr.mxu0 0.0
  %833 = vmatpush2.msra.mxu0 0.0
  %834 = vmatprep.mubr.f32.mxu0 0.0
  %835 = vmatmul.mubr.f32.gmra.mxu0 %v768
  %v836 = vpop.f32.mrf.mxu0
  %v837 = vadd.f32 0.0, %v836
  %v838 = vpop.f32.mrf.mxu0
  %839 = vdwg.mxu0
  %v840 = vadd.f32 %v158, %v837
  %v841 = vxor.u32 %v840, 2147483648
  %v842 = vmul.f32 %v841, 1.442695
  %v843 = vpow.pop %v842
  %v844 = vadd.f32 %v843, 1.0
  %v845 = vrcp.pop %v844
  %v846 = vmul.f32 1.0, %v845
  %v847 = vtanh.pop %v840
  %v848 = vmul.f32 %v846, %v758
  %850 = vrot.lane.b32.xlu0 %v847, 80
  %v851 = vpop.permute.xlu0 %850
  %v853 = vmul.f32 %v846, %v851
  %855 = vrot.lane.b32.xlu0 %v853, 16
  %v856 = vpop.permute.xlu0 %855
  %v858 = vadd.f32 %v848, %v856
  %v859 = vtanh.pop %v858
  %861 = vrot.lane.b32.xlu0 %v859, 16
  %v862 = vpop.permute.xlu0 %861
  %v864 = vmul.f32 %v846, %v862
  %866 = vrot.lane.b32.xlu0 %v864, 96
  %v867 = vpop.permute.xlu0 %866
  %v868 = vsel %vm166, %v867, 0
  %870 = vmatprep.subr.mxu0 0.0
  %871 = vmatpush1.msra.mxu0 0.0
  %872 = vmatprep.subr.mxu0 0.0
  %873 = vmatpush1.msra.mxu0 0.0
  %874 = vmatprep.subr.mxu0 0.0
  %875 = vmatpush1.msra.mxu0 0.0
  %876 = vmatprep.subr.mxu0 0.0
  %877 = vmatpush1.msra.mxu0 0.0
  %878 = vmatprep.subr.mxu0 0.0
  %879 = vmatpush1.msra.mxu0 0.0
  %880 = vmatprep.subr.mxu0 0.0
  %881 = vmatpush1.msra.mxu0 0.0
  %882 = vmatprep.subr.mxu0 0.0
  %883 = vmatpush1.msra.mxu0 0.0
  %884 = vmatprep.subr.mxu0 0.0
  %885 = vmatpush1.msra.mxu0 0.0
  %886 = vmatprep.subr.mxu0 0.0
  %887 = vmatpush1.msra.mxu0 0.0
  %888 = vmatprep.subr.mxu0 0.0
  %889 = vmatpush1.msra.mxu0 0.0
  %890 = vmatprep.subr.mxu0 0.0
  %891 = vmatpush1.msra.mxu0 0.0
  %892 = vmatprep.subr.mxu0 0.0
  %893 = vmatpush1.msra.mxu0 0.0
  %894 = vmatprep.subr.mxu0 0.0
  %895 = vmatpush1.msra.mxu0 0.0
  %896 = vmatprep.subr.mxu0 0.0
  %897 = vmatpush1.msra.mxu0 0.0
  %898 = vmatprep.subr.mxu0 0.0
  %899 = vmatpush1.msra.mxu0 %v13
  %900 = vmatprep.subr.mxu0 0.0
  %901 = vmatpush1.msra.mxu0 %v12
  %902 = vmatprep.subr.mxu0 0.0
  %903 = vmatpush2.msra.mxu0 0.0
  %904 = vmatprep.subr.mxu0 0.0
  %905 = vmatpush2.msra.mxu0 0.0
  %906 = vmatprep.subr.mxu0 0.0
  %907 = vmatpush2.msra.mxu0 0.0
  %908 = vmatprep.subr.mxu0 0.0
  %909 = vmatpush2.msra.mxu0 0.0
  %910 = vmatprep.subr.mxu0 0.0
  %911 = vmatpush2.msra.mxu0 0.0
  %912 = vmatprep.subr.mxu0 0.0
  %913 = vmatpush2.msra.mxu0 0.0
  %914 = vmatprep.subr.mxu0 0.0
  %915 = vmatpush2.msra.mxu0 0.0
  %916 = vmatprep.subr.mxu0 0.0
  %917 = vmatpush2.msra.mxu0 0.0
  %918 = vmatprep.subr.mxu0 0.0
  %919 = vmatpush2.msra.mxu0 0.0
  %920 = vmatprep.subr.mxu0 0.0
  %921 = vmatpush2.msra.mxu0 0.0
  %922 = vmatprep.subr.mxu0 0.0
  %923 = vmatpush2.msra.mxu0 0.0
  %924 = vmatprep.subr.mxu0 0.0
  %925 = vmatpush2.msra.mxu0 0.0
  %926 = vmatprep.subr.mxu0 0.0
  %927 = vmatpush2.msra.mxu0 0.0
  %928 = vmatprep.subr.mxu0 0.0
  %929 = vmatpush2.msra.mxu0 0.0
  %930 = vmatprep.subr.mxu0 0.0
  %931 = vmatpush2.msra.mxu0 0.0
  %932 = vmatprep.subr.mxu0 0.0
  %933 = vmatpush2.msra.mxu0 0.0
  %934 = vmatprep.mubr.f32.mxu0 0.0
  %935 = vmatmul.mubr.f32.gmra.mxu0 %v868
  %v936 = vpop.f32.mrf.mxu0
  %v937 = vadd.f32 0.0, %v936
  %v938 = vpop.f32.mrf.mxu0
  %939 = vdwg.mxu0
  %v940 = vadd.f32 %v163, %v937
  %v941 = vxor.u32 %v940, 2147483648
  %v942 = vmul.f32 %v941, 1.442695
  %v943 = vpow.pop %v942
  %v944 = vadd.f32 %v943, 1.0
  %v945 = vrcp.pop %v944
  %v946 = vmul.f32 1.0, %v945
  %v947 = vtanh.pop %v940
  %v948 = vmul.f32 %v946, %v858
  %950 = vrot.lane.b32.xlu0 %v947, 80
  %v951 = vpop.permute.xlu0 %950
  %v953 = vmul.f32 %v946, %v951
  %955 = vrot.lane.b32.xlu0 %v953, 16
  %v956 = vpop.permute.xlu0 %955
  %v958 = vadd.f32 %v948, %v956
  %v959 = vtanh.pop %v958
  %961 = vrot.lane.b32.xlu0 %v959, 16
  %v962 = vpop.permute.xlu0 %961
  %v964 = vmul.f32 %v946, %v962
  %v965 = vlaneseq
  %v966 = vshrl.u32 %v965, 7
  %v967 = vsub.s32 0, %v966
  %v968 = vrot.slane %v17, %v967
  %970 = vrot.lane.b32.xlu0 %v964, 96
  %v971 = vpop.permute.xlu0 %970
  %v972 = vsel %vm166, %v971, 0
  %974 = vmatprep.subr.mxu0 0.0
  %975 = vmatpush1.msra.mxu0 0.0
  %976 = vmatprep.subr.mxu0 0.0
  %977 = vmatpush1.msra.mxu0 0.0
  %978 = vmatprep.subr.mxu0 0.0
  %979 = vmatpush1.msra.mxu0 0.0
  %980 = vmatprep.subr.mxu0 0.0
  %981 = vmatpush1.msra.mxu0 0.0
  %982 = vmatprep.subr.mxu0 0.0
  %983 = vmatpush1.msra.mxu0 0.0
  %984 = vmatprep.subr.mxu0 0.0
  %985 = vmatpush1.msra.mxu0 0.0
  %986 = vmatprep.subr.mxu0 0.0
  %987 = vmatpush1.msra.mxu0 0.0
  %988 = vmatprep.subr.mxu0 0.0
  %989 = vmatpush1.msra.mxu0 0.0
  %990 = vmatprep.subr.mxu0 0.0
  %991 = vmatpush1.msra.mxu0 0.0
  %992 = vmatprep.subr.mxu0 0.0
  %993 = vmatpush1.msra.mxu0 0.0
  %994 = vmatprep.subr.mxu0 0.0
  %995 = vmatpush1.msra.mxu0 0.0
  %996 = vmatprep.subr.mxu0 0.0
  %997 = vmatpush1.msra.mxu0 0.0
  %998 = vmatprep.subr.mxu0 0.0
  %999 = vmatpush1.msra.mxu0 0.0
  %1000 = vmatprep.subr.mxu0 0.0
  %1001 = vmatpush1.msra.mxu0 0.0
  %1002 = vmatprep.subr.mxu0 0.0
  %1003 = vmatpush1.msra.mxu0 %v16
  %1004 = vmatprep.subr.mxu0 0.0
  %1005 = vmatpush1.msra.mxu0 %v15
  %1006 = vmatprep.subr.mxu0 0.0
  %1007 = vmatpush2.msra.mxu0 0.0
  %1008 = vmatprep.subr.mxu0 0.0
  %1009 = vmatpush2.msra.mxu0 0.0
  %1010 = vmatprep.subr.mxu0 0.0
  %1011 = vmatpush2.msra.mxu0 0.0
  %1012 = vmatprep.subr.mxu0 0.0
  %1013 = vmatpush2.msra.mxu0 0.0
  %1014 = vmatprep.subr.mxu0 0.0
  %1015 = vmatpush2.msra.mxu0 0.0
  %1016 = vmatprep.subr.mxu0 0.0
  %1017 = vmatpush2.msra.mxu0 0.0
  %1018 = vmatprep.subr.mxu0 0.0
  %1019 = vmatpush2.msra.mxu0 0.0
  %1020 = vmatprep.subr.mxu0 0.0
  %1021 = vmatpush2.msra.mxu0 0.0
  %1022 = vmatprep.subr.mxu0 0.0
  %1023 = vmatpush2.msra.mxu0 0.0
  %1024 = vmatprep.subr.mxu0 0.0
  %1025 = vmatpush2.msra.mxu0 0.0
  %1026 = vmatprep.subr.mxu0 0.0
  %1027 = vmatpush2.msra.mxu0 0.0
  %1028 = vmatprep.subr.mxu0 0.0
  %1029 = vmatpush2.msra.mxu0 0.0
  %1030 = vmatprep.subr.mxu0 0.0
  %1031 = vmatpush2.msra.mxu0 0.0
  %1032 = vmatprep.subr.mxu0 0.0
  %1033 = vmatpush2.msra.mxu0 0.0
  %1034 = vmatprep.subr.mxu0 0.0
  %1035 = vmatpush2.msra.mxu0 0.0
  %1036 = vmatprep.subr.mxu0 0.0
  %1037 = vmatpush2.msra.mxu0 0.0
  %1038 = vmatprep.mubr.f32.mxu0 0.0
  %1039 = vmatmul.mubr.f32.gmra.mxu0 %v972
  %v1040 = vpop.f32.mrf.mxu0
  %v1041 = vadd.f32 %v968, %v1040
  %v1042 = vpop.f32.mrf.mxu0
  %1043 = vdwg.mxu0
  %v1044 = vmax.f32 %v1041, 0.0
  %v1045 = vlaneseq
  %v1046 = vshrl.u32 %v1045, 7
  %v1047 = vsub.s32 0, %v1046
  %v1048 = vrot.slane %v18, %v1047
  %v1049 = vmul.f32 %v1044, %v1048
  %vm1050 = vcmask 523264
  %v1051 = vsel %vm1050, %v1049, 0.0
  %1052 = vadd.xlane.f32.xlu0 %v1051
  %v1053 = vpop.xlane.xlu0 %1052
  %v1054 = vlaneseq
  %v1055 = vshrl.u32 %v1054, 7
  %v1056 = vsub.s32 0, %v1055
  %v1057 = vrot.slane %v19, %v1056
  %v1058 = vadd.f32 %v1053, %v1057
  %vm1059 = vcmask 7168
  %1060 = vst.msk [vmem:[%s2] sm:$0xff] %vm1059, %v1058
  // Predicated region
  $region10: #{lstm_model_forward.1} parent=0 // pred_check
    _
  $region11: #{lstm_model_forward.1} parent=0 // pred_check_branch
    %1062 = sbr.rel (0) target = $region13
  $region12: #{lstm_model_forward.1} parent=0 // pred_region
    _
  $region13: #{lstm_model_forward.1} parent=0 // pred_fallthru
    _
  // Predicated region
  $region14: #{lstm_model_forward.1} parent=0 // pred_check
    _
  $region15: #{lstm_model_forward.1} parent=0 // pred_check_branch
    %1064 = sbr.rel (0) target = $region17
  $region16: #{lstm_model_forward.1} parent=0 // pred_region
    _
  $region17: #{lstm_model_forward.1} parent=0 // pred_fallthru
    _

</llo_original>
